<compile_context>
chip_gen: v7x
topology: tpu7x:2x2x1
jax: 0.10.0
libtpu: 0.0.40
codegen_flags: <defaults>
</compile_context>

<pallas_src>
import functools

import jax
import jax.numpy as jnp
from jax.experimental import pallas as pl
from jax.experimental.pallas import tpu as pltpu


def _round_up(x, m):
    return ((x + m - 1) // m) * m


def _cdiv(a, b):
    return (a + b - 1) // b


def _ln_compute(x_ref, w_ref, b_ref, o_ref, eps, inv_h):
    # x block: (row_tile, H). Rows are independent, so garbage rows in a
    # ragged last block are harmless (their stores are masked by Pallas).
    x = x_ref[...].astype(jnp.float32)
    mean = jnp.sum(x, axis=-1, keepdims=True) * inv_h
    xc = x - mean
    var = jnp.sum(xc * xc, axis=-1, keepdims=True) * inv_h
    inv = jax.lax.rsqrt(var + eps)
    y = xc * inv * w_ref[...].astype(jnp.float32)
    if b_ref is not None:
        y = y + b_ref[...].astype(jnp.float32)
    o_ref[...] = y.astype(o_ref.dtype)


def _ln_kernel_bias(x_ref, w_ref, b_ref, o_ref, *, eps, inv_h):
    _ln_compute(x_ref, w_ref, b_ref, o_ref, eps, inv_h)


def _ln_kernel_nobias(x_ref, w_ref, o_ref, *, eps, inv_h):
    _ln_compute(x_ref, w_ref, None, o_ref, eps, inv_h)


def _vmem_capacity_bytes():
    # Generation-aware: 128 MiB on v5e/v6e, 64 MiB per TC on v7x.
    try:
        return int(pltpu.get_tpu_info().vmem_capacity_bytes)
    except Exception:
        return 128 * 1024 * 1024


def layer_norm(x, weight, bias=None, eps=1e-5, row_tile=None):
    """LayerNorm over the last axis. x: (..., H); weight/bias: (H,)."""
    orig_shape = x.shape
    H = int(orig_shape[-1])
    rows = 1
    for d in orig_shape[:-1]:
        rows *= int(d)
    rows = max(rows, 1)

    # Output follows the input dtype (matches F.layer_norm for same-dtype
    # params; halves write bandwidth for bf16 activations).
    out_dtype = x.dtype
    itemsize = jnp.dtype(x.dtype).itemsize
    # Sublane packing of the activation dtype: 8 (4B), 16 (2B), 32 (1B).
    sublane = max(8, 32 // max(itemsize, 1))

    # VMEM limit: ~64 MiB on 128 MiB parts (v5e/v6e), ~42 MiB on v7x (64 MiB).
    vmem_cap = _vmem_capacity_bytes()
    vmem_limit = min(64 * 1024 * 1024, int(vmem_cap * 0.65))
    vmem_budget = int(vmem_limit * 0.75)  # headroom for weight/bias + slack

    if row_tile is None:
        # Per-row bytes: double-buffered input block + double-buffered output
        # block + ~3 full-block f32 temporaries (x_f32, xc, y).
        denom = H * (2 * itemsize + 2 * itemsize + 3 * 4)
        row_tile = max(sublane, vmem_budget // denom)
        row_tile = min(row_tile, 1024)  # ~HBM roofline saturation point
    row_tile = max(sublane, (int(row_tile) // sublane) * sublane)

    # Enough grid steps for megacore + pipelining (aim for >= 8 steps) without
    # shrinking tiles below ~256 rows (per-step overhead would dominate).
    steps_cap = max(_round_up(_cdiv(rows, 8), sublane),
                    min(256, _round_up(rows, sublane)))
    row_tile = min(row_tile, steps_cap)

    grid = (pl.cdiv(rows, row_tile),)

    x2d = x.reshape(rows, H)
    w2d = weight.reshape(1, H)

    in_specs = [
        pl.BlockSpec((row_tile, H), lambda i: (i, 0)),
        pl.BlockSpec((1, H), lambda i: (0, 0)),
    ]
    args = [x2d, w2d]
    if bias is not None:
        in_specs.append(pl.BlockSpec((1, H), lambda i: (0, 0)))
        args.append(bias.reshape(1, H))
        kernel = functools.partial(_ln_kernel_bias, eps=float(eps),
                                   inv_h=1.0 / float(H))
    else:
        kernel = functools.partial(_ln_kernel_nobias, eps=float(eps),
                                   inv_h=1.0 / float(H))

    out2d = pl.pallas_call(
        kernel,
        out_shape=jax.ShapeDtypeStruct((rows, H), out_dtype),
        grid=grid,
        in_specs=in_specs,
        out_specs=pl.BlockSpec((row_tile, H), lambda i: (i, 0)),
        compiler_params=pltpu.CompilerParams(
            dimension_semantics=("parallel",),
            vmem_limit_bytes=vmem_limit,
        ),
    )(*args)

    return out2d.reshape(orig_shape)


if __name__ == "__main__":
    key = jax.random.PRNGKey(0)
    kx, kw, kb = jax.random.split(key, 3)
    B, S, H = 2, 8, 32
    x = jax.random.normal(kx, (B, S, H), dtype=jnp.float32)
    # Module init is ones/zeros; use perturbations so weight/bias paths are
    # actually exercised by the check.
    weight = 1.0 + 0.1 * jax.random.normal(kw, (H,), dtype=jnp.float32)
    bias = 0.1 * jax.random.normal(kb, (H,), dtype=jnp.float32)
    eps = 1e-5

    def ref_layer_norm(x, w, b, eps):
        xf = x.astype(jnp.float32)
        mu = jnp.mean(xf, axis=-1, keepdims=True)
        var = jnp.mean(jnp.square(xf - mu), axis=-1, keepdims=True)
        y = (xf - mu) * jax.lax.rsqrt(var + eps) * w
        if b is not None:
            y = y + b
        return y.astype(x.dtype)

    # bias=True path
    out_b = jax.block_until_ready(layer_norm(x, weight, bias, eps=eps))
    ref_b = ref_layer_norm(x, weight, bias, eps)
    assert out_b.shape == ref_b.shape and out_b.dtype == ref_b.dtype
    assert jnp.allclose(out_b, ref_b, atol=1e-5, rtol=1e-5)

    # bias=False path
    out_nb = jax.block_until_ready(layer_norm(x, weight, None, eps=eps))
    ref_nb = ref_layer_norm(x, weight, None, eps)
    assert out_nb.shape == ref_nb.shape and out_nb.dtype == ref_nb.dtype
    assert jnp.allclose(out_nb, ref_nb, atol=1e-5, rtol=1e-5)

    # Ragged row count (rows not a multiple of the sublane/row tile) to
    # exercise the partial-last-block path (no wrapper padding / slicing).
    x3 = jax.random.normal(kx, (3, 5, H), dtype=jnp.float32)
    out_r = jax.block_until_ready(layer_norm(x3, weight, bias, eps=eps))
    ref_r = ref_layer_norm(x3, weight, bias, eps)
    assert out_r.shape == ref_r.shape
    assert jnp.allclose(out_r, ref_r, atol=1e-5, rtol=1e-5)

    print("KERNEL_OK")
</pallas_src>

<mosaic_0001>
module attributes {stable_mosaic.version = 11 : i64} {
  func.func @_ln_kernel_bias(%arg0: i32, %arg1: memref<16x32xf32, #tpu.memory_space<vmem>>, %arg2: memref<1x32xf32, #tpu.memory_space<vmem>>, %arg3: memref<1x32xf32, #tpu.memory_space<vmem>>, %arg4: memref<16x32xf32, #tpu.memory_space<vmem>>) attributes {dimension_semantics = [#tpu.dimension_semantics<parallel>], iteration_bounds = array<i64: 1>, scalar_prefetch = 0 : i64, scratch_operands = 0 : i64, tpu.core_type = #tpu.core_type<tc>, window_params = [{transform_indices = @transform_0, window_bounds = array<i64: 16, 32>}, {pipeline_mode = #tpu.pipeline_mode<synchronous>, transform_indices = @transform_1, window_bounds = array<i64: 1, 32>}, {pipeline_mode = #tpu.pipeline_mode<synchronous>, transform_indices = @transform_2, window_bounds = array<i64: 1, 32>}, {transform_indices = @transform_3, window_bounds = array<i64: 16, 32>}]} {
    %c0 = arith.constant 0 : index
    %c0_0 = arith.constant 0 : index
    %0 = vector.load %arg1[%c0, %c0_0] : memref<16x32xf32, #tpu.memory_space<vmem>>, vector<16x32xf32>
    %cst = arith.constant dense<0.000000e+00> : vector<16xf32>
    %1 = vector.multi_reduction <add>, %0, %cst [1] : vector<16x32xf32> to vector<16xf32>
    %2 = vector.shape_cast %1 : vector<16xf32> to vector<16x1xf32>
    %cst_1 = arith.constant 3.125000e-02 : f32
    %3 = vector.broadcast %cst_1 : f32 to vector<16x1xf32>
    %4 = arith.mulf %2, %3 : vector<16x1xf32>
    %5 = vector.broadcast %4 : vector<16x1xf32> to vector<16x32xf32>
    %6 = arith.subf %0, %5 : vector<16x32xf32>
    %7 = arith.mulf %6, %6 : vector<16x32xf32>
    %cst_2 = arith.constant dense<0.000000e+00> : vector<16xf32>
    %8 = vector.multi_reduction <add>, %7, %cst_2 [1] : vector<16x32xf32> to vector<16xf32>
    %9 = vector.shape_cast %8 : vector<16xf32> to vector<16x1xf32>
    %cst_3 = arith.constant 3.125000e-02 : f32
    %10 = vector.broadcast %cst_3 : f32 to vector<16x1xf32>
    %11 = arith.mulf %9, %10 : vector<16x1xf32>
    %cst_4 = arith.constant 9.99999974E-6 : f32
    %12 = vector.broadcast %cst_4 : f32 to vector<16x1xf32>
    %13 = arith.addf %11, %12 : vector<16x1xf32>
    %14 = math.rsqrt %13 : vector<16x1xf32>
    %15 = vector.broadcast %14 : vector<16x1xf32> to vector<16x32xf32>
    %16 = arith.mulf %6, %15 : vector<16x32xf32>
    %c0_5 = arith.constant 0 : index
    %c0_6 = arith.constant 0 : index
    %17 = vector.load %arg2[%c0_5, %c0_6] : memref<1x32xf32, #tpu.memory_space<vmem>>, vector<1x32xf32>
    %18 = vector.broadcast %17 : vector<1x32xf32> to vector<16x32xf32>
    %19 = arith.mulf %16, %18 : vector<16x32xf32>
    %c0_7 = arith.constant 0 : index
    %c0_8 = arith.constant 0 : index
    %20 = vector.load %arg3[%c0_7, %c0_8] : memref<1x32xf32, #tpu.memory_space<vmem>>, vector<1x32xf32>
    %21 = vector.broadcast %20 : vector<1x32xf32> to vector<16x32xf32>
    %22 = arith.addf %19, %21 : vector<16x32xf32>
    %c0_9 = arith.constant 0 : index
    %c0_10 = arith.constant 0 : index
    %23 = vector.load %arg4[%c0_9, %c0_10] : memref<16x32xf32, #tpu.memory_space<vmem>>, vector<16x32xf32>
    tpu.vector_store %arg4[%c0_9, %c0_10], %22 {strides = array<i32>} : memref<16x32xf32, #tpu.memory_space<vmem>>, vector<16x32xf32>,
    return
  }
  func.func @transform_0(%arg0: i32) -> (i32, i32) {
    %c0_i32 = arith.constant 0 : i32
    %c0_i32_0 = arith.constant 0 : i32
    return %arg0, %c0_i32 : i32, i32
  }
  func.func @transform_1(%arg0: i32) -> (i32, i32) {
    %c0_i32 = arith.constant 0 : i32
    %c0_i32_0 = arith.constant 0 : i32
    %c0_i32_1 = arith.constant 0 : i32
    return %c0_i32, %c0_i32_0 : i32, i32
  }
  func.func @transform_2(%arg0: i32) -> (i32, i32) {
    %c0_i32 = arith.constant 0 : i32
    %c0_i32_0 = arith.constant 0 : i32
    %c0_i32_1 = arith.constant 0 : i32
    return %c0_i32, %c0_i32_0 : i32, i32
  }
  func.func @transform_3(%arg0: i32) -> (i32, i32) {
    %c0_i32 = arith.constant 0 : i32
    %c0_i32_0 = arith.constant 0 : i32
    return %arg0, %c0_i32 : i32, i32
  }
}

</mosaic_0001>

<llo_original>
// kernel: tpu_custom_call.1
$region0: #{tpu_custom_call.1}
  #allocation0 [shape = 'u32[]', space=smem, size = 0x4, offset = 0x4, fixed_abs, tag = 'smem constant byte address 0x4 - core index']
  #allocation1 [shape = 'u32[144,128]{1,0:T(1,128)}', space=vmem, size = 0x12000, scoped, tag = 'internal scratch']
  %s0 = inlined_call_operand.hbm [shape: f32[16,32], index: 0, kind: input, shape index: {}]
  %s1 = inlined_call_operand.hbm [shape: f32[1,32], index: 1, kind: input, shape index: {}]
  %s2 = inlined_call_operand.hbm [shape: f32[1,32], index: 2, kind: input, shape index: {}]
  %s3 = inlined_call_operand.hbm [shape: f32[16,32], index: 3, kind: output, shape index: {}]
  %s4 = sld [smem:[#allocation0]]
  $region34: #{tpu_custom_call.1} parent=0
    _
  %s6 = ssub.s32 1, %s4
  %s7 = scalar_select 0, %s6, %s4
  $region1: #{tpu_custom_call.1} parent=0
    #allocation2 [shape = 'u8[8192]{0}', space=vmem, size = 0x2000, scoped, tag = 'input window, operand 0, single buffered']
    #allocation3 [shape = 's32[1]{0}', space=sflag, size = 0x4, scoped, tag = 'scoped memory for tpu_custom_call.1']
    #allocation4 [shape = 's32[1]{0}', space=sflag, size = 0x4, scoped, tag = 'scoped memory for tpu_custom_call.1']
    #allocation5 [shape = 'u8[512]{0}', space=vmem, size = 0x400, scoped, tag = 'input window, operand 1, single buffered']
    #allocation6 [shape = 's32[1]{0}', space=sflag, size = 0x4, scoped, tag = 'scoped memory for tpu_custom_call.1']
    #allocation7 [shape = 'u8[512]{0}', space=vmem, size = 0x400, scoped, tag = 'input window, operand 2, single buffered']
    #allocation8 [shape = 'u8[8192]{0}', space=vmem, size = 0x2000, scoped, tag = 'output window, operand 0, single buffered']
    %8 = vsyncpa [#allocation3], 0
    %9 = vsyncpa [#allocation6], 0
    %10 = vsyncpa [#allocation4], 0
    // Predicated region
    $region2: #{tpu_custom_call.1} parent=1 // pred_check
      _
    $region3: #{tpu_custom_call.1} parent=1 // pred_check_branch
      %12 = sbr.rel (0) target = $region5
    $region4: #{tpu_custom_call.1} parent=1 // pred_region
      %s14 = ssub.s32 256, 256
      %15 = vsyncadd [#allocation3], %s14
      %s16 = sshll.u32 [#allocation2], 4
      %s17 = int_to_ptr.vmem [resolvable:$true] %s16
      %22 = dma.hbm_to_vmem [thread:$0]  %s0, 256, %s17, [#allocation3], 128, 128, 8
    $region5: #{tpu_custom_call.1} parent=1 // pred_fallthru
      _
    // Predicated region
    $region6: #{tpu_custom_call.1} parent=1 // pred_check
      _
    $region7: #{tpu_custom_call.1} parent=1 // pred_check_branch
      %24 = sbr.rel (0) target = $region9
    $region8: #{tpu_custom_call.1} parent=1 // pred_region
      %s26 = ssub.s32 16, 16
      %27 = vsyncadd [#allocation6], %s26
      %s29 = sshll.u32 [#allocation5], 4
      %s30 = int_to_ptr.vmem [resolvable:$true] %s29
      %32 = dma.hbm_to_vmem [thread:$0]  %s1, 16, %s30, [#allocation6]
    $region9: #{tpu_custom_call.1} parent=1 // pred_fallthru
      _
    // Predicated region
    $region10: #{tpu_custom_call.1} parent=1 // pred_check
      _
    $region11: #{tpu_custom_call.1} parent=1 // pred_check_branch
      %34 = sbr.rel (0) target = $region13
    $region12: #{tpu_custom_call.1} parent=1 // pred_region
      %s36 = ssub.s32 16, 16
      %37 = vsyncadd [#allocation6], %s36
      %s39 = sshll.u32 [#allocation7], 4
      %s40 = int_to_ptr.vmem [resolvable:$true] %s39
      %42 = dma.hbm_to_vmem [thread:$0]  %s2, 16, %s40, [#allocation6]
    $region13: #{tpu_custom_call.1} parent=1 // pred_fallthru
      _
    // Predicated region
    $region14: #{tpu_custom_call.1} parent=1 // pred_check
      _
    $region15: #{tpu_custom_call.1} parent=1 // pred_check_branch
      %44 = sbr.rel (0) target = $region17
    $region16: #{tpu_custom_call.1} parent=1 // pred_region
      %45 = dma.done [#allocation3], 256
    $region17: #{tpu_custom_call.1} parent=1 // pred_fallthru
      _
    // Predicated region
    $region18: #{tpu_custom_call.1} parent=1 // pred_check
      _
    $region19: #{tpu_custom_call.1} parent=1 // pred_check_branch
      %47 = sbr.rel (0) target = $region21
    $region20: #{tpu_custom_call.1} parent=1 // pred_region
      %48 = dma.done [#allocation6], 16
    $region21: #{tpu_custom_call.1} parent=1 // pred_fallthru
      _
    // Predicated region
    $region22: #{tpu_custom_call.1} parent=1 // pred_check
      _
    $region23: #{tpu_custom_call.1} parent=1 // pred_check_branch
      %50 = sbr.rel (0) target = $region25
    $region24: #{tpu_custom_call.1} parent=1 // pred_region
      %51 = dma.done [#allocation6], 16
    $region25: #{tpu_custom_call.1} parent=1 // pred_fallthru
      _
    %v52 = vld [vmem:[#allocation2] sm:$0xff]
    %v53 = vld [vmem:[#allocation2 + $0x8] sm:$0xff]
    %vm54 = vcmask 261120
    %v55 = vsel %vm54, %v52, 0.0
    %56 = vadd.xlane.f32.xlu0 %v55
    %v57 = vpop.xlane.xlu0 %56
    %v58 = vsel %vm54, %v53, 0.0
    %59 = vadd.xlane.f32.xlu0 %v58
    %v60 = vpop.xlane.xlu0 %59
    %v61 = vmul.f32 %v57, 0.03125
    %v62 = vmul.f32 %v60, 0.03125
    %v63 = vsub.f32 %v52, %v61
    %v64 = vsub.f32 %v53, %v62
    %v65 = vmul.f32 %v63, %v63
    %v66 = vmul.f32 %v64, %v64
    %v67 = vsel %vm54, %v65, 0.0
    %68 = vadd.xlane.f32.xlu0 %v67
    %v69 = vpop.xlane.xlu0 %68
    %v70 = vsel %vm54, %v66, 0.0
    %71 = vadd.xlane.f32.xlu0 %v70
    %v72 = vpop.xlane.xlu0 %71
    %v73 = vmul.f32 %v69, 0.03125
    %v74 = vmul.f32 %v72, 0.03125
    %v75 = vadd.f32 %v73, 1e-05
    %v76 = vadd.f32 %v74, 1e-05
    %v77 = vrsqrt.pop %v75
    %v78 = vrsqrt.pop %v76
    %v79 = vmul.f32 %v63, %v77
    %v80 = vmul.f32 %v64, %v78
    %v81 = vld [vmem:[#allocation5] sm:$0x1]
    %v83 = vlaneseq
    %v84 = vshrl.u32 %v83, 7
    %v85 = vsub.s32 0, %v84
    %v86 = vrot.slane %v81, %v85
    %v88 = vmul.f32 %v79, %v86
    %v89 = vmul.f32 %v80, %v86
    %v90 = vld [vmem:[#allocation7] sm:$0x1]
    %v92 = vlaneseq
    %v93 = vshrl.u32 %v92, 7
    %v94 = vsub.s32 0, %v93
    %v95 = vrot.slane %v90, %v94
    %v97 = vadd.f32 %v88, %v95
    %v98 = vadd.f32 %v89, %v95
    %99 = vst.msk [vmem:[#allocation8] sm:$0xff] %vm54, %v97
    %100 = vst.msk [vmem:[#allocation8 + $0x8] sm:$0xff] %vm54, %v98
    // Predicated region
    $region26: #{tpu_custom_call.1} parent=1 // pred_check
      _
    $region27: #{tpu_custom_call.1} parent=1 // pred_check_branch
      %102 = sbr.rel (0) target = $region29
    $region28: #{tpu_custom_call.1} parent=1 // pred_region
      %s104 = ssub.s32 256, 256
      %105 = vsyncadd [#allocation4], %s104
      %s106 = sshll.u32 [#allocation8], 4
      %s107 = int_to_ptr.vmem [resolvable:$true] %s106
      %112 = dma.vmem_to_hbm [thread:$0]  %s107, 256, %s3, [#allocation4], 128, 128, 8
    $region29: #{tpu_custom_call.1} parent=1 // pred_fallthru
      _
    // Predicated region
    $region30: #{tpu_custom_call.1} parent=1 // pred_check
      _
    $region31: #{tpu_custom_call.1} parent=1 // pred_check_branch
      %114 = sbr.rel (0) target = $region33
    $region32: #{tpu_custom_call.1} parent=1 // pred_region
      %115 = dma.done [#allocation4], 256
    $region33: #{tpu_custom_call.1} parent=1 // pred_fallthru
      _
    %116 = vsyncpa [#allocation3], 1
    %117 = vsyncpa [#allocation6], 1
    %118 = vsyncpa [#allocation4], 1

</llo_original>
